<compile_context>
chip_gen: v7x
topology: tpu7x:2x2x1
jax: 0.10.0
libtpu: 0.0.40
codegen_flags: <defaults>
</compile_context>

<pallas_src>
import math
from collections import namedtuple

import jax
import jax.numpy as jnp
from jax import lax
from jax.experimental import pallas as pl
from jax.experimental.pallas import tpu as pltpu


# ----------------------------------------------------------------------------
# Pallas kernels
# ----------------------------------------------------------------------------

def _linear_kernel(x_ref, w_ref, b_ref, o_ref, acc_ref):
    # x: (tm, tk) bf16, w: (tk, tn) bf16 [K,N layout], b: (1, tn) f32, o: (tm, tn)
    k = pl.program_id(2)

    @pl.when(k == 0)
    def _():
        acc_ref[...] = jnp.zeros_like(acc_ref)

    acc_ref[...] += jnp.dot(x_ref[...], w_ref[...],
                            preferred_element_type=jnp.float32)

    @pl.when(k == pl.num_programs(2) - 1)
    def _():
        o_ref[...] = (acc_ref[...] + b_ref[...]).astype(o_ref.dtype)


def _local_reparam_kernel(x_ref, wmu_ref, wvar_ref, bmu_ref, bvar_ref, eps_ref,
                          o_ref, mu_acc, var_acc):
    # x: (tm, tk) f32 (kept f32 so the x*x variance path stays accurate);
    # wmu: (tk, tn) bf16, wvar: (tk, tn) f32 (= exp(2*log_sigma), hoisted & cached);
    # bmu/bvar: (1, tn) f32; eps: (tm, tn) f32; o: (tm, tn)
    k = pl.program_id(2)

    @pl.when(k == 0)
    def _():
        mu_acc[...] = jnp.zeros_like(mu_acc)
        var_acc[...] = jnp.zeros_like(var_acc)

    x = x_ref[...]
    mu_acc[...] += jnp.dot(x.astype(jnp.bfloat16), wmu_ref[...],
                           preferred_element_type=jnp.float32)
    var_acc[...] += jnp.dot(x * x, wvar_ref[...],
                            preferred_element_type=jnp.float32)

    @pl.when(k == pl.num_programs(2) - 1)
    def _():
        act_mu = mu_acc[...] + bmu_ref[...]
        act_var = var_acc[...] + bvar_ref[...]
        act_std = jnp.sqrt(act_var + 1e-16)
        o_ref[...] = (act_mu + act_std * eps_ref[...]).astype(o_ref.dtype)


# ----------------------------------------------------------------------------
# Tiling / VMEM planning
# ----------------------------------------------------------------------------

_LANE = 128
_TM_MAX = 256   # max batch tile used for VMEM budgeting

_Plan = namedtuple("_Plan", ["Kp", "Np", "tk", "tn", "vmem_limit"])


def _round_up(v, m):
    return ((v + m - 1) // m) * m


def _cdiv(a, b):
    return -(-a // b)


def _vmem_capacity():
    """Physical VMEM bytes for the current TPU generation (fallback: 64 MiB, the
    smallest of v5e/v6e/v7x, so the plan is always safe)."""
    try:
        cap = int(pltpu.get_tpu_info().vmem_capacity_bytes)
        if cap > 0:
            return cap
    except Exception:
        pass
    return 64 * 1024 * 1024


def _make_plan(K, N):
    """Pick (tk, tn) sized to the device VMEM budget (accounting for the heavier
    local-reparam kernel so the same plan serves both kernels).  Full K/N residency
    is preferred (weights read once, k-grid of length 1); N then K shrink when the
    budget (e.g. v7x's 64 MiB VMEM) does not allow it."""
    cap = _vmem_capacity()
    budget = int(cap * 0.45)       # target for the double-buffered working set
    vmem_limit = int(cap * 0.70)   # scoped limit handed to Mosaic

    Kp = _round_up(K, _LANE)
    Np = _round_up(N, _LANE)
    tm = _TM_MAX

    def need(tk, tn):
        w_streams = 2 * tk * tn * (2 + 4)     # bf16 w_mu + f32 w_var, double-buffered
        x_stream = 2 * tm * tk * 4            # f32 x
        mn_stream = 2 * tm * tn * (4 + 4)     # f32 out + f32 eps
        bias = 2 * tn * 4 * 2
        accs = tm * tn * 4 * 2
        return w_streams + x_stream + mn_stream + bias + accs

    tk, tn = Kp, Np
    while need(tk, tn) > budget and tn > _LANE:        # shrink N first (keep K resident)
        tn = _LANE * max(1, (tn // _LANE + 1) // 2)
    while need(tk, tn) > budget and tk > _LANE:
        tk = _LANE * max(1, (tk // _LANE + 1) // 2)

    Kp = _round_up(Kp, tk)
    Np = _round_up(Np, tn)
    return _Plan(Kp=Kp, Np=Np, tk=tk, tn=tn, vmem_limit=vmem_limit)


def _batch_tile(B):
    """Batch tile <= _TM_MAX chosen to minimize padding (cdiv-split, 16-aligned)."""
    n = _cdiv(B, _TM_MAX)
    tm = _round_up(_cdiv(B, n), 16)
    return tm, _round_up(B, tm)


def _adjust_tn_for_parallel(n_i, Np, tn):
    """Ensure >= 2 'parallel' grid tiles so dual-TensorCore chips (v7x) get work on
    both cores; costs at most a couple of extra grid steps on single-TC chips."""
    if n_i >= 2 or Np // tn >= 2:
        return tn
    blocks = Np // _LANE
    if blocks < 2:
        return tn
    for d in range(blocks // 2, 0, -1):   # largest proper divisor -> even tiling of Np
        if blocks % d == 0:
            return _LANE * d
    return tn


def _pad2(a, rows, cols):
    pr = rows - a.shape[0]
    pc = cols - a.shape[1]
    if pr == 0 and pc == 0:
        return a
    return jnp.pad(a, ((0, pr), (0, pc)))


# ----------------------------------------------------------------------------
# pallas_call wrappers (padded, (K, N)-layout inputs)
# ----------------------------------------------------------------------------

def _matmul_bias(xp, w_kn, b_row, *, tm, tk, tn, out_dtype, vmem_limit):
    Bp, Kp = xp.shape
    Np = w_kn.shape[1]
    grid = (Bp // tm, Np // tn, Kp // tk)
    return pl.pallas_call(
        _linear_kernel,
        out_shape=jax.ShapeDtypeStruct((Bp, Np), out_dtype),
        grid=grid,
        in_specs=[
            pl.BlockSpec((tm, tk), lambda i, j, k: (i, k)),
            pl.BlockSpec((tk, tn), lambda i, j, k: (k, j)),
            pl.BlockSpec((1, tn), lambda i, j, k: (0, j)),
        ],
        out_specs=pl.BlockSpec((tm, tn), lambda i, j, k: (i, j)),
        scratch_shapes=[pltpu.VMEM((tm, tn), jnp.float32)],
        compiler_params=pltpu.CompilerParams(
            dimension_semantics=("parallel", "parallel", "arbitrary"),
            vmem_limit_bytes=vmem_limit),
    )(xp, w_kn, b_row)


def _local_reparam(xp, wmu_kn, wvar_kn, bmu_row, bvar_row, epsp, *,
                   tm, tk, tn, out_dtype, vmem_limit):
    Bp, Kp = xp.shape
    Np = wmu_kn.shape[1]
    grid = (Bp // tm, Np // tn, Kp // tk)
    return pl.pallas_call(
        _local_reparam_kernel,
        out_shape=jax.ShapeDtypeStruct((Bp, Np), out_dtype),
        grid=grid,
        in_specs=[
            pl.BlockSpec((tm, tk), lambda i, j, k: (i, k)),
            pl.BlockSpec((tk, tn), lambda i, j, k: (k, j)),
            pl.BlockSpec((tk, tn), lambda i, j, k: (k, j)),
            pl.BlockSpec((1, tn), lambda i, j, k: (0, j)),
            pl.BlockSpec((1, tn), lambda i, j, k: (0, j)),
            pl.BlockSpec((tm, tn), lambda i, j, k: (i, j)),
        ],
        out_specs=pl.BlockSpec((tm, tn), lambda i, j, k: (i, j)),
        scratch_shapes=[pltpu.VMEM((tm, tn), jnp.float32),
                        pltpu.VMEM((tm, tn), jnp.float32)],
        compiler_params=pltpu.CompilerParams(
            dimension_semantics=("parallel", "parallel", "arbitrary"),
            vmem_limit_bytes=vmem_limit),
    )(xp, wmu_kn, wvar_kn, bmu_row, bvar_row, epsp)


# ----------------------------------------------------------------------------
# Convenience wrappers (PyTorch layout) — used for the reference checks below.
# The module itself uses cached padded layouts and skips this per-call work.
# ----------------------------------------------------------------------------

def linear_pallas(x, w, b):
    """out = x @ w.T + b with w in PyTorch (F_out, F_in) layout."""
    B, K = x.shape
    N = w.shape[0]
    plan = _make_plan(K, N)
    tm, Bp = _batch_tile(B)
    tn = _adjust_tn_for_parallel(Bp // tm, plan.Np, plan.tn)
    xp = _pad2(x.astype(jnp.bfloat16), Bp, plan.Kp)
    w_kn = _pad2(jnp.transpose(w), plan.Kp, plan.Np).astype(jnp.bfloat16)
    b_row = _pad2(b.reshape(1, -1).astype(jnp.float32), 1, plan.Np)
    out = _matmul_bias(xp, w_kn, b_row, tm=tm, tk=plan.tk, tn=tn,
                       out_dtype=x.dtype, vmem_limit=plan.vmem_limit)
    return out[:B, :N]


def local_reparam_pallas(x, w_mu, w_var, b_mu, b_var, eps):
    """out = x@w_mu.T + b_mu + sqrt(x^2 @ w_var.T + b_var + 1e-16) * eps."""
    B, K = x.shape
    N = w_mu.shape[0]
    plan = _make_plan(K, N)
    tm, Bp = _batch_tile(B)
    tn = _adjust_tn_for_parallel(Bp // tm, plan.Np, plan.tn)
    xp = _pad2(x.astype(jnp.float32), Bp, plan.Kp)
    wmu_kn = _pad2(jnp.transpose(w_mu), plan.Kp, plan.Np).astype(jnp.bfloat16)
    wvar_kn = _pad2(jnp.transpose(w_var).astype(jnp.float32), plan.Kp, plan.Np)
    bmu_row = _pad2(b_mu.reshape(1, -1).astype(jnp.float32), 1, plan.Np)
    bvar_row = _pad2(b_var.reshape(1, -1).astype(jnp.float32), 1, plan.Np)
    epsp = _pad2(eps.astype(jnp.float32), Bp, plan.Np)
    out = _local_reparam(xp, wmu_kn, wvar_kn, bmu_row, bvar_row, epsp,
                         tm=tm, tk=plan.tk, tn=tn,
                         out_dtype=x.dtype, vmem_limit=plan.vmem_limit)
    return out[:B, :N]


# ----------------------------------------------------------------------------
# BayesLinearMF module
# ----------------------------------------------------------------------------

class BayesLinearMF:
    def __init__(self, single_eps, local_reparam, in_features, out_features,
                 bias=True, deterministic=False, *, param_key):
        self.in_features = in_features
        self.out_features = out_features
        self.single_eps = single_eps
        self.local_reparam = local_reparam
        self.deterministic = deterministic
        self.bias = bool(bias)

        stdv = 1.0 / math.sqrt(in_features)
        k1, k2 = jax.random.split(param_key)
        self.weight_mu = jax.random.uniform(
            k1, (out_features, in_features), jnp.float32, -stdv, stdv)
        self.weight_log_sigma = jnp.full((out_features, in_features), -5.0, jnp.float32)
        if self.bias:
            self.bias_mu = jax.random.uniform(
                k2, (out_features,), jnp.float32, -stdv, stdv)
            self.bias_log_sigma = jnp.full((out_features,), -5.0, jnp.float32)
        else:
            self.bias_mu = None
            self.bias_log_sigma = None

        self._plan = _make_plan(in_features, out_features)
        self._refresh_cache()

    def _refresh_cache(self):
        """Derive padded (K, N)-layout caches once (re-call after any parameter
        update).  Forward passes then do zero weight transposes/pads/exps."""
        Kp, Np = self._plan.Kp, self._plan.Np
        w_mu_kn = _pad2(jnp.transpose(self.weight_mu), Kp, Np)
        w_sig_kn = _pad2(jnp.transpose(jnp.exp(self.weight_log_sigma)), Kp, Np)
        self._w_mu_kn_f32 = w_mu_kn                       # for single-eps sampling
        self._w_sigma_kn_f32 = w_sig_kn
        self._w_mu_kn_bf16 = w_mu_kn.astype(jnp.bfloat16)  # mu matmul path (bf16 MXU)
        self._w_var_kn_f32 = w_sig_kn * w_sig_kn            # exp(2*log_sigma), f32
        if self.bias:
            self._b_mu_row = _pad2(self.bias_mu.reshape(1, -1), 1, Np)
            b_sig = _pad2(jnp.exp(self.bias_log_sigma).reshape(1, -1), 1, Np)
        else:
            self._b_mu_row = jnp.zeros((1, Np), jnp.float32)
            b_sig = jnp.zeros((1, Np), jnp.float32)
        self._b_sigma_row = b_sig
        self._b_var_row = b_sig * b_sig

    def __call__(self, x, key):
        B = x.shape[0]
        p = self._plan
        tm, Bp = _batch_tile(B)
        tn = _adjust_tn_for_parallel(Bp // tm, p.Np, p.tn)
        kw, kb = jax.random.split(key)
        out_dtype = x.dtype

        if self.single_eps or self.deterministic:
            if self.deterministic:
                w_kn = self._w_mu_kn_bf16
                b_row = self._b_mu_row
            else:
                # Sample directly in the padded (K, N) layout: no transpose, XLA fuses
                # mu + sigma*eps; padded rows/cols stay exactly zero (mu = sigma = 0).
                eps_w = jax.random.normal(kw, (p.Kp, p.Np), jnp.float32)
                w_kn = (self._w_mu_kn_f32
                        + self._w_sigma_kn_f32 * eps_w).astype(jnp.bfloat16)
                eps_b = jax.random.normal(kb, (1, p.Np), jnp.float32)
                b_row = self._b_mu_row + self._b_sigma_row * eps_b
            xp = _pad2(x.astype(jnp.bfloat16), Bp, p.Kp)
            out = _matmul_bias(xp, w_kn, b_row, tm=tm, tk=p.tk, tn=tn,
                               out_dtype=out_dtype, vmem_limit=p.vmem_limit)
        else:
            # Local reparameterization.  The per-sample-weight branch (single_eps=False,
            # local_reparam=False) is also routed here: for mean-field Gaussian weights,
            # bmm(W_mu + sigma*eps_b, x_b) + bias_b has exactly this output distribution,
            # so we avoid materializing a (B, F_out, F_in) sampled weight tensor in HBM.
            # TODO(synk): if exact per-sample weight realizations are required (not just
            # the identical output distribution), sample them in-kernel via
            # pltpu.prng_seed / pltpu.stateful_normal instead of this reroute.
            xp = _pad2(x.astype(jnp.float32), Bp, p.Kp)          # x kept f32 for x*x path
            eps = jax.random.normal(kw, (Bp, p.Np), jnp.float32)  # generated pre-padded
            out = _local_reparam(xp, self._w_mu_kn_bf16, self._w_var_kn_f32,
                                 self._b_mu_row, self._b_var_row, eps,
                                 tm=tm, tk=p.tk, tn=tn,
                                 out_dtype=out_dtype, vmem_limit=p.vmem_limit)

        if Bp == B and p.Np == self.out_features:
            return out                       # no padding applied -> no slice copy
        return out[:B, :self.out_features]


# ----------------------------------------------------------------------------
# Demo / correctness checks
# ----------------------------------------------------------------------------

if __name__ == "__main__":
    key = jax.random.PRNGKey(0)
    k_param, k_x, k_fwd, k_eps = jax.random.split(key, 4)

    B, F_in, F_out = 16, 32, 16
    x = jax.random.normal(k_x, (B, F_in), jnp.float32)

    configs = [
        dict(single_eps=False, local_reparam=False, deterministic=True),   # deterministic
        dict(single_eps=True,  local_reparam=False, deterministic=False),  # single-eps
        dict(single_eps=False, local_reparam=True,  deterministic=False),  # local reparam
        dict(single_eps=False, local_reparam=False, deterministic=False),  # per-sample
    ]
    keys = jax.random.split(k_fwd, len(configs))

    ok = True
    for cfg, kf in zip(configs, keys):
        layer = BayesLinearMF(cfg["single_eps"], cfg["local_reparam"], F_in, F_out,
                              bias=True, deterministic=cfg["deterministic"],
                              param_key=k_param)
        out = jax.block_until_ready(layer(x, kf))
        ok &= (out.shape == (B, F_out)) and bool(jnp.all(jnp.isfinite(out)))

    # 1) deterministic branch vs JAX reference (on bf16-rounded operands, f32 accumulate)
    det_layer = BayesLinearMF(False, False, F_in, F_out, bias=True,
                              deterministic=True, param_key=k_param)
    det_out = jax.block_until_ready(det_layer(x, keys[0]))
    x_bf = x.astype(jnp.bfloat16).astype(jnp.float32)
    w_bf = det_layer.weight_mu.astype(jnp.bfloat16).astype(jnp.float32)
    det_ref = jnp.matmul(x_bf, w_bf.T, precision=lax.Precision.HIGHEST) \
        + det_layer.bias_mu[None, :]
    ok &= bool(jnp.allclose(det_out, det_ref, atol=2e-3, rtol=2e-3))

    # 2) local-reparam kernel vs JAX reference with identical eps
    w_var = jnp.exp(2.0 * det_layer.weight_log_sigma)
    b_var = jnp.exp(2.0 * det_layer.bias_log_sigma)
    eps = jax.random.normal(k_eps, (B, F_out), jnp.float32)
    lr_out = jax.block_until_ready(
        local_reparam_pallas(x, det_layer.weight_mu, w_var,
                             det_layer.bias_mu, b_var, eps))
    mu_ref = jnp.matmul(x_bf, w_bf.T, precision=lax.Precision.HIGHEST) \
        + det_layer.bias_mu[None, :]
    var_ref = jnp.matmul(x * x, w_var.T, precision=lax.Precision.HIGHEST) \
        + b_var[None, :]
    lr_ref = mu_ref + jnp.sqrt(var_ref + 1e-16) * eps
    ok &= bool(jnp.allclose(lr_out, lr_ref, atol=2e-3, rtol=2e-3))

    print("KERNEL_OK" if ok else "KERNEL_MISMATCH")
</pallas_src>

<mosaic_0001>
module attributes {stable_mosaic.version = 11 : i64} {
  func.func @_linear_kernel(%arg0: i32, %arg1: i32, %arg2: i32, %arg3: memref<16x128xbf16, #tpu.memory_space<vmem>>, %arg4: memref<128x128xbf16, #tpu.memory_space<vmem>>, %arg5: memref<1x128xf32, #tpu.memory_space<vmem>>, %arg6: memref<16x128xf32, #tpu.memory_space<vmem>>, %arg7: memref<16x128xf32, #tpu.memory_space<vmem>>) attributes {dimension_semantics = [#tpu.dimension_semantics<parallel>, #tpu.dimension_semantics<parallel>, #tpu.dimension_semantics<arbitrary>], iteration_bounds = array<i64: 1, 1, 1>, scalar_prefetch = 0 : i64, scratch_operands = 1 : i64, tpu.core_type = #tpu.core_type<tc>, window_params = [{transform_indices = @transform_0, window_bounds = array<i64: 16, 128>}, {transform_indices = @transform_1, window_bounds = array<i64: 128, 128>}, {transform_indices = @transform_2, window_bounds = array<i64: 1, 128>}, {transform_indices = @transform_3, window_bounds = array<i64: 16, 128>}]} {
    %c0_i32 = arith.constant 0 : i32
    %0 = arith.cmpi eq, %arg2, %c0_i32 : i32
    %1 = arith.extui %0 : i1 to i32
    %c0_i32_0 = arith.constant 0 : i32
    %2 = arith.cmpi ne, %1, %c0_i32_0 : i32
    scf.if %2 {
      %cst_10 = arith.constant 0.000000e+00 : f32
      %12 = vector.broadcast %cst_10 : f32 to vector<16x128xf32>
      %c0_11 = arith.constant 0 : index
      %c0_12 = arith.constant 0 : index
      %13 = vector.load %arg7[%c0_11, %c0_12] : memref<16x128xf32, #tpu.memory_space<vmem>>, vector<16x128xf32>
      tpu.vector_store %arg7[%c0_11, %c0_12], %12 {strides = array<i32>} : memref<16x128xf32, #tpu.memory_space<vmem>>, vector<16x128xf32>,
    } else {
    }
    %c0 = arith.constant 0 : index
    %c0_1 = arith.constant 0 : index
    %3 = vector.load %arg7[%c0, %c0_1] : memref<16x128xf32, #tpu.memory_space<vmem>>, vector<16x128xf32>
    %c0_2 = arith.constant 0 : index
    %c0_3 = arith.constant 0 : index
    %4 = vector.load %arg3[%c0_2, %c0_3] : memref<16x128xbf16, #tpu.memory_space<vmem>>, vector<16x128xbf16>
    %c0_4 = arith.constant 0 : index
    %c0_5 = arith.constant 0 : index
    %5 = vector.load %arg4[%c0_4, %c0_5] : memref<128x128xbf16, #tpu.memory_space<vmem>>, vector<128x128xbf16>
    %cst = arith.constant dense<0.000000e+00> : vector<16x128xf32>
    %6 = tpu.matmul %4, %5, %cst {dimension_numbers = #tpu.dot_dimension_numbers<[1], [0], [0], [1], [0, 0, 1, 1], [], []>} : vector<16x128xbf16>, vector<128x128xbf16>, vector<16x128xf32> -> vector<16x128xf32>
    %7 = arith.addf %3, %6 : vector<16x128xf32>
    %c0_6 = arith.constant 0 : index
    %c0_7 = arith.constant 0 : index
    %8 = vector.load %arg7[%c0_6, %c0_7] : memref<16x128xf32, #tpu.memory_space<vmem>>, vector<16x128xf32>
    tpu.vector_store %arg7[%c0_6, %c0_7], %7 {strides = array<i32>} : memref<16x128xf32, #tpu.memory_space<vmem>>, vector<16x128xf32>,
    %c0_i32_8 = arith.constant 0 : i32
    %9 = arith.cmpi eq, %arg2, %c0_i32_8 : i32
    %10 = arith.extui %9 : i1 to i32
    %c0_i32_9 = arith.constant 0 : i32
    %11 = arith.cmpi ne, %10, %c0_i32_9 : i32
    scf.if %11 {
      %c0_10 = arith.constant 0 : index
      %c0_11 = arith.constant 0 : index
      %12 = vector.load %arg7[%c0_10, %c0_11] : memref<16x128xf32, #tpu.memory_space<vmem>>, vector<16x128xf32>
      %c0_12 = arith.constant 0 : index
      %c0_13 = arith.constant 0 : index
      %13 = vector.load %arg5[%c0_12, %c0_13] : memref<1x128xf32, #tpu.memory_space<vmem>>, vector<1x128xf32>
      %14 = vector.broadcast %13 : vector<1x128xf32> to vector<16x128xf32>
      %15 = arith.addf %12, %14 : vector<16x128xf32>
      %c0_14 = arith.constant 0 : index
      %c0_15 = arith.constant 0 : index
      %16 = vector.load %arg6[%c0_14, %c0_15] : memref<16x128xf32, #tpu.memory_space<vmem>>, vector<16x128xf32>
      tpu.vector_store %arg6[%c0_14, %c0_15], %15 {strides = array<i32>} : memref<16x128xf32, #tpu.memory_space<vmem>>, vector<16x128xf32>,
    } else {
    }
    return
  }
  func.func @transform_0(%arg0: i32, %arg1: i32, %arg2: i32) -> (i32, i32) {
    %c0_i32 = arith.constant 0 : i32
    return %arg0, %arg2 : i32, i32
  }
  func.func @transform_1(%arg0: i32, %arg1: i32, %arg2: i32) -> (i32, i32) {
    %c0_i32 = arith.constant 0 : i32
    return %arg2, %arg1 : i32, i32
  }
  func.func @transform_2(%arg0: i32, %arg1: i32, %arg2: i32) -> (i32, i32) {
    %c0_i32 = arith.constant 0 : i32
    %c0_i32_0 = arith.constant 0 : i32
    return %c0_i32, %arg1 : i32, i32
  }
  func.func @transform_3(%arg0: i32, %arg1: i32, %arg2: i32) -> (i32, i32) {
    %c0_i32 = arith.constant 0 : i32
    return %arg0, %arg1 : i32, i32
  }
}

</mosaic_0001>

<llo_original>
// kernel: tpu_custom_call.1
$region0: #{tpu_custom_call.1}
  #allocation0 [shape = 'u32[]', space=smem, size = 0x4, offset = 0x4, fixed_abs, tag = 'smem constant byte address 0x4 - core index']
  #allocation1 [shape = 'u32[144,128]{1,0:T(1,128)}', space=vmem, size = 0x12000, scoped, tag = 'internal scratch']
  #allocation2 [shape = 'f32[16,128]{1,0:T(8,128)}', space=vmem, size = 0x2000, scoped, tag = 'scratch operand']
  %s0 = inlined_call_operand.hbm [shape: bf16[16,128], index: 0, kind: input, shape index: {}]
  %s1 = inlined_call_operand.hbm [shape: bf16[128,128], index: 1, kind: input, shape index: {}]
  %s2 = inlined_call_operand.vmem [shape: f32[1,128], index: 2, kind: input, shape index: {}]
  %s3 = inlined_call_operand.hbm [shape: f32[16,128], index: 3, kind: output, shape index: {}]
  %s4 = sld [smem:[#allocation0]]
  $region38: #{tpu_custom_call.1} parent=0
    _
  %s6 = ssub.s32 1, %s4
  %s7 = scalar_select 0, %s6, %s4
  $region1: #{tpu_custom_call.1} parent=0
    #allocation3 [shape = 'u8[4096]{0}', space=vmem, size = 0x1000, scoped, tag = 'input window, operand 0, single buffered']
    #allocation4 [shape = 's32[1]{0}', space=sflag, size = 0x4, scoped, tag = 'scoped memory for tpu_custom_call.1']
    #allocation5 [shape = 's32[1]{0}', space=sflag, size = 0x4, scoped, tag = 'scoped memory for tpu_custom_call.1']
    #allocation6 [shape = 'u8[32768]{0}', space=vmem, size = 0x8000, scoped, tag = 'input window, operand 1, single buffered']
    #allocation7 [shape = 's32[1]{0}', space=sflag, size = 0x4, scoped, tag = 'scoped memory for tpu_custom_call.1']
    #allocation8 [shape = 'u8[8192]{0}', space=vmem, size = 0x2000, scoped, tag = 'output window, operand 0, single buffered']
    %8 = vsyncpa [#allocation4], 0
    %9 = vsyncpa [#allocation7], 0
    %10 = vsyncpa [#allocation5], 0
    // Predicated region
    $region2: #{tpu_custom_call.1} parent=1 // pred_check
      _
    $region3: #{tpu_custom_call.1} parent=1 // pred_check_branch
      %12 = sbr.rel (0) target = $region5
    $region4: #{tpu_custom_call.1} parent=1 // pred_region
      %s14 = ssub.s32 128, 128
      %15 = vsyncadd [#allocation4], %s14
      %s16 = sshll.u32 [#allocation3], 4
      %s17 = int_to_ptr.vmem [resolvable:$true] %s16
      %22 = dma.hbm_to_vmem [thread:$0]  %s0, 128, %s17, [#allocation4], 64, 64, 4
    $region5: #{tpu_custom_call.1} parent=1 // pred_fallthru
      _
    // Predicated region
    $region6: #{tpu_custom_call.1} parent=1 // pred_check
      _
    $region7: #{tpu_custom_call.1} parent=1 // pred_check_branch
      %24 = sbr.rel (0) target = $region9
    $region8: #{tpu_custom_call.1} parent=1 // pred_region
      %s26 = ssub.s32 1024, 1024
      %27 = vsyncadd [#allocation7], %s26
      %s28 = sshll.u32 [#allocation6], 4
      %s29 = int_to_ptr.vmem [resolvable:$true] %s28
      %34 = dma.hbm_to_vmem [thread:$0]  %s1, 1024, %s29, [#allocation7], 64, 64, 4
    $region9: #{tpu_custom_call.1} parent=1 // pred_fallthru
      _
    // Predicated region
    $region10: #{tpu_custom_call.1} parent=1 // pred_check
      _
    $region11: #{tpu_custom_call.1} parent=1 // pred_check_branch
      %36 = sbr.rel (0) target = $region13
    $region12: #{tpu_custom_call.1} parent=1 // pred_region
      _
    $region13: #{tpu_custom_call.1} parent=1 // pred_fallthru
      _
    // Predicated region
    $region14: #{tpu_custom_call.1} parent=1 // pred_check
      _
    $region15: #{tpu_custom_call.1} parent=1 // pred_check_branch
      %38 = sbr.rel (0) target = $region17
    $region16: #{tpu_custom_call.1} parent=1 // pred_region
      %39 = dma.done [#allocation4], 128
    $region17: #{tpu_custom_call.1} parent=1 // pred_fallthru
      _
    // Predicated region
    $region18: #{tpu_custom_call.1} parent=1 // pred_check
      _
    $region19: #{tpu_custom_call.1} parent=1 // pred_check_branch
      %41 = sbr.rel (0) target = $region21
    $region20: #{tpu_custom_call.1} parent=1 // pred_region
      %42 = dma.done [#allocation7], 1024
    $region21: #{tpu_custom_call.1} parent=1 // pred_fallthru
      _
    %p44 = scmp.eq.s32.totalorder 0, 0
    // Predicated region
    $region22: #{tpu_custom_call.1} parent=1 // pred_check
      %p45 = pneg %p44
    $region23: #{tpu_custom_call.1} parent=1 // pred_check_branch
      %47 = sbr.rel (%p45) target = $region25
    $region24: #{tpu_custom_call.1} parent=1 // pred_region
      %48 = vst [vmem:[#allocation2] sm:$0xff] 0.0
      %49 = vst [vmem:[#allocation2 + $0x8] sm:$0xff] 0.0
    $region25: #{tpu_custom_call.1} parent=1 // pred_fallthru
      _
    %v50 = vld [vmem:[#allocation2] sm:$0xff]
    %v51 = vld [vmem:[#allocation2 + $0x8] sm:$0xff]
    %v52 = vld [vmem:[#allocation3] sm:$0xf]
    %v53 = vld [vmem:[#allocation3 + $0x4] sm:$0xf]
    %v54 = vld [vmem:[#allocation6] sm:$0xf]
    %v55 = vld [vmem:[#allocation6 + $0x4] sm:$0xf]
    %v56 = vld [vmem:[#allocation6 + $0x8] sm:$0xf]
    %v57 = vld [vmem:[#allocation6 + $0xc] sm:$0xf]
    %v58 = vld [vmem:[#allocation6 + $0x10] sm:$0xf]
    %v59 = vld [vmem:[#allocation6 + $0x14] sm:$0xf]
    %v60 = vld [vmem:[#allocation6 + $0x18] sm:$0xf]
    %v61 = vld [vmem:[#allocation6 + $0x1c] sm:$0xf]
    %v62 = vld [vmem:[#allocation6 + $0x20] sm:$0xf]
    %v63 = vld [vmem:[#allocation6 + $0x24] sm:$0xf]
    %v64 = vld [vmem:[#allocation6 + $0x28] sm:$0xf]
    %v65 = vld [vmem:[#allocation6 + $0x2c] sm:$0xf]
    %v66 = vld [vmem:[#allocation6 + $0x30] sm:$0xf]
    %v67 = vld [vmem:[#allocation6 + $0x34] sm:$0xf]
    %v68 = vld [vmem:[#allocation6 + $0x38] sm:$0xf]
    %v69 = vld [vmem:[#allocation6 + $0x3c] sm:$0xf]
    %v72 = vunpack.c.l.b16 %v52
    %v73 = vunpack.c.l.b16 %v53
    %v74 = vpack.c.b16 %v73, %v72
    %v92 = vunpack.c.l.b16 %v54
    %v93 = vunpack.c.l.b16 %v55
    %v94 = vunpack.c.l.b16 %v56
    %v95 = vunpack.c.l.b16 %v57
    %v96 = vunpack.c.l.b16 %v58
    %v97 = vunpack.c.l.b16 %v59
    %v98 = vunpack.c.l.b16 %v60
    %v99 = vunpack.c.l.b16 %v61
    %v100 = vunpack.c.l.b16 %v62
    %v101 = vunpack.c.l.b16 %v63
    %v102 = vunpack.c.l.b16 %v64
    %v103 = vunpack.c.l.b16 %v65
    %v104 = vunpack.c.l.b16 %v66
    %v105 = vunpack.c.l.b16 %v67
    %v106 = vunpack.c.l.b16 %v68
    %v107 = vunpack.c.l.b16 %v69
    %v108 = vpack.c.b16 %v93, %v92
    %v109 = vpack.c.b16 %v95, %v94
    %v110 = vpack.c.b16 %v97, %v96
    %v111 = vpack.c.b16 %v99, %v98
    %v112 = vpack.c.b16 %v101, %v100
    %v113 = vpack.c.b16 %v103, %v102
    %v114 = vpack.c.b16 %v105, %v104
    %v115 = vpack.c.b16 %v107, %v106
    %124 = vmatprep.subr.bf16.mxu0 0
    %125 = vmatpush1.bf16.msra.mxu0 %v108
    %126 = vmatprep.subr.bf16.mxu0 0
    %127 = vmatpush1.bf16.msra.mxu0 %v109
    %128 = vmatprep.subr.bf16.mxu0 0
    %129 = vmatpush1.bf16.msra.mxu0 %v110
    %130 = vmatprep.subr.bf16.mxu0 0
    %131 = vmatpush1.bf16.msra.mxu0 %v111
    %132 = vmatprep.subr.bf16.mxu0 0
    %133 = vmatpush1.bf16.msra.mxu0 %v112
    %134 = vmatprep.subr.bf16.mxu0 0
    %135 = vmatpush1.bf16.msra.mxu0 %v113
    %136 = vmatprep.subr.bf16.mxu0 0
    %137 = vmatpush1.bf16.msra.mxu0 %v114
    %138 = vmatprep.subr.bf16.mxu0 0
    %139 = vmatpush1.bf16.msra.mxu0 %v115
    %140 = vmatprep.subr.bf16.mxu0 0
    %141 = vmatpush1.bf16.msra.mxu0 0
    %142 = vmatprep.subr.bf16.mxu0 0
    %143 = vmatpush1.bf16.msra.mxu0 0
    %144 = vmatprep.subr.bf16.mxu0 0
    %145 = vmatpush1.bf16.msra.mxu0 0
    %146 = vmatprep.subr.bf16.mxu0 0
    %147 = vmatpush1.bf16.msra.mxu0 0
    %148 = vmatprep.subr.bf16.mxu0 0
    %149 = vmatpush1.bf16.msra.mxu0 0
    %150 = vmatprep.subr.bf16.mxu0 0
    %151 = vmatpush1.bf16.msra.mxu0 0
    %152 = vmatprep.subr.bf16.mxu0 0
    %153 = vmatpush1.bf16.msra.mxu0 0
    %154 = vmatprep.subr.bf16.mxu0 0
    %155 = vmatpush1.bf16.msra.mxu0 0
    %156 = vmatprep.mubr.bf16.mxu0 0
    %157 = vmatmul.mubr.bf16.gmra.mrb[0].mxu0 %v74
    %v158 = vpop.f32.mrb[0].mxu0
    %v159 = vadd.f32 0.0, %v158
    %v160 = vpop.f32.mrb[0].mxu0
    %v161 = vpop.f32.mrb[0].mxu0
    %v162 = vadd.f32 0.0, %v161
    %v163 = vpop.f32.mrb[0].mxu0
    %164 = vdwg.mxu0
    %v165 = vadd.f32 %v50, %v159
    %v166 = vadd.f32 %v51, %v162
    %167 = vst [vmem:[#allocation2] sm:$0xff] %v165
    %168 = vst [vmem:[#allocation2 + $0x8] sm:$0xff] %v166
    // Predicated region
    $region26: #{tpu_custom_call.1} parent=1 // pred_check
      %p169 = pneg %p44
    $region27: #{tpu_custom_call.1} parent=1 // pred_check_branch
      %171 = sbr.rel (%p169) target = $region29
    $region28: #{tpu_custom_call.1} parent=1 // pred_region
      %v172 = vld [vmem:[#allocation2] sm:$0xff]
      %v173 = vld [vmem:[#allocation2 + $0x8] sm:$0xff]
      %v174 = vld [vmem:[%s2] sm:$0x1]
      %v176 = vlaneseq
      %v177 = vshrl.u32 %v176, 7
      %v178 = vsub.s32 0, %v177
      %v179 = vrot.slane %v174, %v178
      %v181 = vadd.f32 %v172, %v179
      %v182 = vadd.f32 %v173, %v179
      %183 = vst [vmem:[#allocation8] sm:$0xff] %v181
      %184 = vst [vmem:[#allocation8 + $0x8] sm:$0xff] %v182
    $region29: #{tpu_custom_call.1} parent=1 // pred_fallthru
      _
    // Predicated region
    $region30: #{tpu_custom_call.1} parent=1 // pred_check
      _
    $region31: #{tpu_custom_call.1} parent=1 // pred_check_branch
      %186 = sbr.rel (0) target = $region33
    $region32: #{tpu_custom_call.1} parent=1 // pred_region
      %s188 = ssub.s32 256, 256
      %189 = vsyncadd [#allocation5], %s188
      %s190 = sshll.u32 [#allocation8], 4
      %s191 = int_to_ptr.vmem [resolvable:$true] %s190
      %196 = dma.vmem_to_hbm [thread:$0]  %s191, 256, %s3, [#allocation5], 128, 128, 8
    $region33: #{tpu_custom_call.1} parent=1 // pred_fallthru
      _
    // Predicated region
    $region34: #{tpu_custom_call.1} parent=1 // pred_check
      _
    $region35: #{tpu_custom_call.1} parent=1 // pred_check_branch
      %198 = sbr.rel (0) target = $region37
    $region36: #{tpu_custom_call.1} parent=1 // pred_region
      %199 = dma.done [#allocation5], 256
    $region37: #{tpu_custom_call.1} parent=1 // pred_fallthru
      _
    %200 = vsyncpa [#allocation4], 1
    %201 = vsyncpa [#allocation7], 1
    %202 = vsyncpa [#allocation5], 1

</llo_original>
